<compile_context>
chip_gen: v5e
topology: v5e:2x2
jax: 0.10.0
libtpu: 0.0.40
codegen_flags: <defaults>
</compile_context>

<pallas_src>
import functools

import jax
import jax.numpy as jnp
from jax import lax
from jax.experimental import pallas as pl
from jax.experimental.pallas import tpu as pltpu


def _focal_loss_kernel(pred_ref, tgt_ref, out_ref, *, alpha, gamma, ignore_index,
                       num_pixels, bound_check):
    # pred_ref: (1, C, S, 128) native dtype; tgt_ref: (1, S, 128) int
    tgt = tgt_ref[0].astype(jnp.int32)                 # (S, 128)
    s, l = tgt.shape
    c = pred_ref.shape[1]

    # ---- streamed class reduction (no (C,S,128) temporaries) -----------------
    # pass 1: running max over classes + select of the target-class logit
    def p1(k, carry):
        rm, tl = carry
        xk = pred_ref[0, k].astype(jnp.float32)        # (S, 128)
        return jnp.maximum(rm, xk), jnp.where(tgt == k, xk, tl)

    x0 = pred_ref[0, 0].astype(jnp.float32)
    init = (x0, jnp.where(tgt == 0, x0, jnp.zeros_like(x0)))

    # pass 2: sum of exp(logit - row_max) over classes
    def p2(k, se):
        xk = pred_ref[0, k].astype(jnp.float32)
        return se + jnp.exp(xk - row_max)

    if c <= 128:
        carry = init
        for k in range(1, c):
            carry = p1(k, carry)
        row_max, tgt_logit = carry
        sumexp = jnp.zeros((s, l), jnp.float32)
        for k in range(c):
            sumexp = p2(k, sumexp)
    else:
        row_max, tgt_logit = lax.fori_loop(1, c, p1, init, unroll=8)
        sumexp = lax.fori_loop(0, c, p2, jnp.zeros((s, l), jnp.float32), unroll=8)

    # ---- focal term ----------------------------------------------------------
    ce = (jnp.log(sumexp) + row_max) - tgt_logit       # cross entropy, (S, 128)
    pt = jnp.exp(-ce)                                  # single EUP exp, == softmax prob

    one_minus_pt = 1.0 - pt
    if float(gamma) == int(gamma) and gamma >= 0:
        weight = jnp.ones_like(one_minus_pt)
        for _ in range(int(gamma)):
            weight = weight * one_minus_pt
    else:
        weight = jnp.power(one_minus_pt, gamma)

    focal = alpha * weight * ce                        # (S, 128)

    # ---- validity mask, applied once at the end ------------------------------
    valid = None
    if bound_check:
        row_ids = lax.broadcasted_iota(jnp.int32, (s, l), 0)
        lane_ids = lax.broadcasted_iota(jnp.int32, (s, l), 1)
        pix_idx = pl.program_id(1) * (s * l) + row_ids * l + lane_ids
        valid = pix_idx < num_pixels
    if ignore_index is not None:
        keep = tgt != ignore_index
        valid = keep if valid is None else jnp.logical_and(valid, keep)
    if valid is not None:
        focal = jnp.where(valid, focal, 0.0)

    # lane/sublane-dense per-tile partial sum
    if s % 8 == 0 and s >= 8:
        partial = jnp.sum(focal.reshape(s // 8, 8, l), axis=0)     # (8, 128)
    else:
        partial = focal                                            # tiny-image case
    out_ref[...] = partial[None, None]


def focal_loss(pred, target, *, alpha=1.0, gamma=2.0, ignore_index=None,
               tile_pixels=None):
    """pred: (N, C, H, W) float logits, target: (N, H, W) int labels."""
    n, c, h, w = pred.shape
    pix = h * w
    itemsize = jnp.dtype(pred.dtype).itemsize

    # NCHW -> (N, C, HW): pure reshape of contiguous data, no transpose.
    pix128 = pl.cdiv(pix, 128) * 128
    n_sub = pix128 // 128                                  # 128-pixel rows per image

    pred3 = pred.reshape(n, c, pix)
    tgt2 = target.reshape(n, pix)
    if tgt2.dtype != jnp.int32:
        tgt2 = tgt2.astype(jnp.int32)
    if pix128 != pix:
        # TODO(synk): avoid this full-tensor pad when H*W isn't a multiple of 128
        # (costs one extra HBM read+write of pred); ragged tails beyond that are
        # already handled mask-free-of-padding inside the kernel.
        pred3 = jnp.pad(pred3, ((0, 0), (0, 0), (0, pix128 - pix)))
        tgt2 = jnp.pad(tgt2, ((0, 0), (0, pix128 - pix)), constant_values=-1)

    # fold pixels onto (sublane, lane): fully dense vregs for any class count
    pred4 = pred3.reshape(n, c, n_sub, 128)
    tgt3 = tgt2.reshape(n, n_sub, 128)

    # ---- tile selection ------------------------------------------------------
    if n_sub < 8:
        sub_tile = n_sub                                   # tiny images: one block
    else:
        if tile_pixels is None:
            bpp = itemsize * c
            tp = (4 * 1024 * 1024) // bpp                  # ~4 MiB of logits / block
            tp = max(tp, -(-(16 * 1024) // itemsize))      # >=16 KiB per-class DMA run
            tp = min(tp, (8 * 1024 * 1024) // bpp)         # pred block <= 8 MiB
            tp = min(tp, 128 * 1024)                       # bound (S,128) f32 temps
            # enough tiles so both v7x TensorCores get work
            desired_tiles = pl.cdiv(4, n)
            tp = min(tp, pl.cdiv(pl.cdiv(pix128, desired_tiles), 1024) * 1024)
            tile_pixels = max(1024, (tp // 1024) * 1024)
        tile_pixels = max(1024, (int(tile_pixels) // 1024) * 1024)
        want_rows = tile_pixels // 128
        sub_tile = max(8, min((want_rows // 8) * 8, (n_sub // 8) * 8))

    n_pix_tiles = pl.cdiv(n_sub, sub_tile)
    out_rows = 8 if sub_tile % 8 == 0 else sub_tile
    covered = n_pix_tiles * sub_tile * 128
    bound_check = covered != pix                           # padded / ragged last tile

    kernel = functools.partial(
        _focal_loss_kernel,
        alpha=float(alpha), gamma=float(gamma), ignore_index=ignore_index,
        num_pixels=pix, bound_check=bound_check)

    partials = pl.pallas_call(
        kernel,
        out_shape=jax.ShapeDtypeStruct((n, n_pix_tiles, out_rows, 128), jnp.float32),
        grid_spec=pltpu.PrefetchScalarGridSpec(
            num_scalar_prefetch=0,
            grid=(n, n_pix_tiles),
            in_specs=[
                pl.BlockSpec((1, c, sub_tile, 128), lambda i, j: (i, 0, j, 0)),
                pl.BlockSpec((1, sub_tile, 128), lambda i, j: (i, j, 0)),
            ],
            out_specs=pl.BlockSpec((1, 1, out_rows, 128), lambda i, j: (i, j, 0, 0)),
        ),
        compiler_params=pltpu.CompilerParams(
            dimension_semantics=("parallel", "parallel"),
            vmem_limit_bytes=32 * 1024 * 1024),
    )(pred4, tgt3)

    # mean over all N*H*W pixels (ignored pixels contribute 0 but are counted)
    return (jnp.sum(partials) / (n * pix)).astype(pred.dtype)


def _focal_loss_ref(pred, target, *, alpha=1.0, gamma=2.0, ignore_index=None):
    """Pure-JAX reference mirroring F.cross_entropy(reduction='none') + focal."""
    n, c, h, w = pred.shape
    logits = jnp.transpose(pred, (0, 2, 3, 1)).reshape(-1, c).astype(jnp.float32)
    tgt = target.reshape(-1).astype(jnp.int32)
    logz = jax.scipy.special.logsumexp(logits, axis=-1)
    tgt_logit = jnp.take_along_axis(logits, tgt[:, None], axis=-1)[:, 0]
    ce = logz - tgt_logit
    if ignore_index is not None:
        ce = jnp.where(tgt == ignore_index, 0.0, ce)
    pt = jnp.exp(-ce)
    return jnp.mean(alpha * (1.0 - pt) ** gamma * ce)


if __name__ == "__main__":
    key = jax.random.PRNGKey(0)
    k1, k2 = jax.random.split(key)

    N, C, H, W = 2, 4, 16, 16
    pred = jax.random.normal(k1, (N, C, H, W), dtype=jnp.float32)
    target = jax.random.randint(k2, (N, H, W), 0, C, dtype=jnp.int32)

    out = focal_loss(pred, target, alpha=1.0, gamma=2.0, ignore_index=None)
    out = jax.block_until_ready(out)

    ref = _focal_loss_ref(pred, target, alpha=1.0, gamma=2.0, ignore_index=None)
    assert jnp.allclose(out, ref, rtol=1e-4, atol=1e-5), (out, ref)

    print("KERNEL_OK")
</pallas_src>

<mosaic_0001>
module attributes {stable_mosaic.version = 11 : i64} {
  func.func @_focal_loss_kernel(%arg0: i32, %arg1: i32, %arg2: memref<1x4x2x128xf32, #tpu.memory_space<vmem>>, %arg3: memref<1x2x128xi32, #tpu.memory_space<vmem>>, %arg4: memref<1x1x2x128xf32, #tpu.memory_space<vmem>>) attributes {dimension_semantics = [#tpu.dimension_semantics<parallel>, #tpu.dimension_semantics<parallel>], iteration_bounds = array<i64: 2, 1>, scalar_prefetch = 0 : i64, scratch_operands = 0 : i64, tpu.core_type = #tpu.core_type<tc>, window_params = [{transform_indices = @transform_0, window_bounds = array<i64: 1, 4, 2, 128>}, {transform_indices = @transform_1, window_bounds = array<i64: 1, 2, 128>}, {transform_indices = @transform_2, window_bounds = array<i64: 1, 1, 2, 128>}]} {
    %c0 = arith.constant 0 : index
    %c0_0 = arith.constant 0 : index
    %c0_1 = arith.constant 0 : index
    %0 = vector.load %arg3[%c0, %c0_0, %c0_1] : memref<1x2x128xi32, #tpu.memory_space<vmem>>, vector<1x2x128xi32>
    %1 = vector.shape_cast %0 : vector<1x2x128xi32> to vector<2x128xi32>
    %c0_2 = arith.constant 0 : index
    %c0_3 = arith.constant 0 : index
    %c0_4 = arith.constant 0 : index
    %c0_5 = arith.constant 0 : index
    %2 = vector.load %arg2[%c0_2, %c0_3, %c0_4, %c0_5] : memref<1x4x2x128xf32, #tpu.memory_space<vmem>>, vector<1x1x2x128xf32>
    %3 = vector.shape_cast %2 : vector<1x1x2x128xf32> to vector<2x128xf32>
    %c0_i32 = arith.constant 0 : i32
    %4 = vector.broadcast %c0_i32 : i32 to vector<2x128xi32>
    %5 = arith.cmpi eq, %1, %4 : vector<2x128xi32>
    %cst = arith.constant 0.000000e+00 : f32
    %6 = vector.broadcast %cst : f32 to vector<2x128xf32>
    %7 = arith.select %5, %3, %6 : vector<2x128xi1>, vector<2x128xf32>
    %c0_6 = arith.constant 0 : index
    %c1 = arith.constant 1 : index
    %c0_7 = arith.constant 0 : index
    %c0_8 = arith.constant 0 : index
    %8 = vector.load %arg2[%c0_6, %c1, %c0_7, %c0_8] : memref<1x4x2x128xf32, #tpu.memory_space<vmem>>, vector<1x1x2x128xf32>
    %9 = vector.shape_cast %8 : vector<1x1x2x128xf32> to vector<2x128xf32>
    %10 = arith.maximumf %3, %9 : vector<2x128xf32>
    %c1_i32 = arith.constant 1 : i32
    %11 = vector.broadcast %c1_i32 : i32 to vector<2x128xi32>
    %12 = arith.cmpi eq, %1, %11 : vector<2x128xi32>
    %13 = arith.select %12, %9, %7 : vector<2x128xi1>, vector<2x128xf32>
    %c0_9 = arith.constant 0 : index
    %c2 = arith.constant 2 : index
    %c0_10 = arith.constant 0 : index
    %c0_11 = arith.constant 0 : index
    %14 = vector.load %arg2[%c0_9, %c2, %c0_10, %c0_11] : memref<1x4x2x128xf32, #tpu.memory_space<vmem>>, vector<1x1x2x128xf32>
    %15 = vector.shape_cast %14 : vector<1x1x2x128xf32> to vector<2x128xf32>
    %16 = arith.maximumf %10, %15 : vector<2x128xf32>
    %c2_i32 = arith.constant 2 : i32
    %17 = vector.broadcast %c2_i32 : i32 to vector<2x128xi32>
    %18 = arith.cmpi eq, %1, %17 : vector<2x128xi32>
    %19 = arith.select %18, %15, %13 : vector<2x128xi1>, vector<2x128xf32>
    %c0_12 = arith.constant 0 : index
    %c3 = arith.constant 3 : index
    %c0_13 = arith.constant 0 : index
    %c0_14 = arith.constant 0 : index
    %20 = vector.load %arg2[%c0_12, %c3, %c0_13, %c0_14] : memref<1x4x2x128xf32, #tpu.memory_space<vmem>>, vector<1x1x2x128xf32>
    %21 = vector.shape_cast %20 : vector<1x1x2x128xf32> to vector<2x128xf32>
    %22 = arith.maximumf %16, %21 : vector<2x128xf32>
    %c3_i32 = arith.constant 3 : i32
    %23 = vector.broadcast %c3_i32 : i32 to vector<2x128xi32>
    %24 = arith.cmpi eq, %1, %23 : vector<2x128xi32>
    %25 = arith.select %24, %21, %19 : vector<2x128xi1>, vector<2x128xf32>
    %cst_15 = arith.constant 0.000000e+00 : f32
    %26 = vector.broadcast %cst_15 : f32 to vector<2x128xf32>
    %c0_16 = arith.constant 0 : index
    %c0_17 = arith.constant 0 : index
    %c0_18 = arith.constant 0 : index
    %c0_19 = arith.constant 0 : index
    %27 = vector.load %arg2[%c0_16, %c0_17, %c0_18, %c0_19] : memref<1x4x2x128xf32, #tpu.memory_space<vmem>>, vector<1x1x2x128xf32>
    %28 = vector.shape_cast %27 : vector<1x1x2x128xf32> to vector<2x128xf32>
    %29 = arith.subf %28, %22 : vector<2x128xf32>
    %30 = math.exp %29 : vector<2x128xf32>
    %31 = arith.addf %26, %30 : vector<2x128xf32>
    %c0_20 = arith.constant 0 : index
    %c1_21 = arith.constant 1 : index
    %c0_22 = arith.constant 0 : index
    %c0_23 = arith.constant 0 : index
    %32 = vector.load %arg2[%c0_20, %c1_21, %c0_22, %c0_23] : memref<1x4x2x128xf32, #tpu.memory_space<vmem>>, vector<1x1x2x128xf32>
    %33 = vector.shape_cast %32 : vector<1x1x2x128xf32> to vector<2x128xf32>
    %34 = arith.subf %33, %22 : vector<2x128xf32>
    %35 = math.exp %34 : vector<2x128xf32>
    %36 = arith.addf %31, %35 : vector<2x128xf32>
    %c0_24 = arith.constant 0 : index
    %c2_25 = arith.constant 2 : index
    %c0_26 = arith.constant 0 : index
    %c0_27 = arith.constant 0 : index
    %37 = vector.load %arg2[%c0_24, %c2_25, %c0_26, %c0_27] : memref<1x4x2x128xf32, #tpu.memory_space<vmem>>, vector<1x1x2x128xf32>
    %38 = vector.shape_cast %37 : vector<1x1x2x128xf32> to vector<2x128xf32>
    %39 = arith.subf %38, %22 : vector<2x128xf32>
    %40 = math.exp %39 : vector<2x128xf32>
    %41 = arith.addf %36, %40 : vector<2x128xf32>
    %c0_28 = arith.constant 0 : index
    %c3_29 = arith.constant 3 : index
    %c0_30 = arith.constant 0 : index
    %c0_31 = arith.constant 0 : index
    %42 = vector.load %arg2[%c0_28, %c3_29, %c0_30, %c0_31] : memref<1x4x2x128xf32, #tpu.memory_space<vmem>>, vector<1x1x2x128xf32>
    %43 = vector.shape_cast %42 : vector<1x1x2x128xf32> to vector<2x128xf32>
    %44 = arith.subf %43, %22 : vector<2x128xf32>
    %45 = math.exp %44 : vector<2x128xf32>
    %46 = arith.addf %41, %45 : vector<2x128xf32>
    %47 = math.log %46 : vector<2x128xf32>
    %48 = arith.addf %47, %22 : vector<2x128xf32>
    %49 = arith.subf %48, %25 : vector<2x128xf32>
    %cst_32 = arith.constant 0.000000e+00 : f32
    %50 = vector.broadcast %cst_32 : f32 to vector<2x128xf32>
    %51 = arith.subf %50, %49 : vector<2x128xf32>
    %52 = math.exp %51 : vector<2x128xf32>
    %cst_33 = arith.constant 1.000000e+00 : f32
    %53 = vector.broadcast %cst_33 : f32 to vector<2x128xf32>
    %54 = arith.subf %53, %52 : vector<2x128xf32>
    %cst_34 = arith.constant 1.000000e+00 : f32
    %55 = vector.broadcast %cst_34 : f32 to vector<2x128xf32>
    %56 = arith.mulf %55, %54 : vector<2x128xf32>
    %57 = arith.mulf %56, %54 : vector<2x128xf32>
    %cst_35 = arith.constant 1.000000e+00 : f32
    %58 = vector.broadcast %cst_35 : f32 to vector<2x128xf32>
    %59 = arith.mulf %58, %57 : vector<2x128xf32>
    %60 = arith.mulf %59, %49 : vector<2x128xf32>
    %61 = vector.shape_cast %60 : vector<2x128xf32> to vector<1x1x2x128xf32>
    %c0_36 = arith.constant 0 : index
    %c0_37 = arith.constant 0 : index
    %c0_38 = arith.constant 0 : index
    %c0_39 = arith.constant 0 : index
    %62 = vector.load %arg4[%c0_36, %c0_37, %c0_38, %c0_39] : memref<1x1x2x128xf32, #tpu.memory_space<vmem>>, vector<1x1x2x128xf32>
    tpu.vector_store %arg4[%c0_36, %c0_37, %c0_38, %c0_39], %61 {strides = array<i32>} : memref<1x1x2x128xf32, #tpu.memory_space<vmem>>, vector<1x1x2x128xf32>,
    return
  }
  func.func @transform_0(%arg0: i32, %arg1: i32) -> (i32, i32, i32, i32) {
    %c0_i32 = arith.constant 0 : i32
    %c0_i32_0 = arith.constant 0 : i32
    %c0_i32_1 = arith.constant 0 : i32
    return %arg0, %c0_i32, %arg1, %c0_i32_0 : i32, i32, i32, i32
  }
  func.func @transform_1(%arg0: i32, %arg1: i32) -> (i32, i32, i32) {
    %c0_i32 = arith.constant 0 : i32
    %c0_i32_0 = arith.constant 0 : i32
    return %arg0, %arg1, %c0_i32 : i32, i32, i32
  }
  func.func @transform_2(%arg0: i32, %arg1: i32) -> (i32, i32, i32, i32) {
    %c0_i32 = arith.constant 0 : i32
    %c0_i32_0 = arith.constant 0 : i32
    %c0_i32_1 = arith.constant 0 : i32
    return %arg0, %arg1, %c0_i32, %c0_i32_0 : i32, i32, i32, i32
  }
}

</mosaic_0001>

<llo_original>
// kernel: tpu_custom_call.1
$region0: #{tpu_custom_call.1}
  #allocation0 [shape = 'u32[]', space=smem, size = 0x4, offset = 0x4, fixed_abs, tag = 'smem constant byte address 0x4 - core index']
  #allocation1 [shape = 'u32[72,128]{1,0:T(1,128)}', space=vmem, size = 0x9000, scoped, tag = 'internal scratch']
  %s0 = inlined_call_operand.hbm [shape: f32[2,4,2,128], index: 0, kind: input, shape index: {}]
  %s1 = inlined_call_operand.hbm [shape: s32[2,2,128], index: 1, kind: input, shape index: {}]
  %s2 = inlined_call_operand.hbm [shape: f32[2,1,2,128], index: 2, kind: output, shape index: {}]
  %s3 = sld [smem:[#allocation0]]
  $region49: #{tpu_custom_call.1} parent=0
    _
  %s5 = ssub.s32 1, %s3
  %s6 = scalar_select 0, %s5, %s3
  $region1: #{tpu_custom_call.1} parent=0
    #allocation2 [shape = 'u8[8192]{0}', space=vmem, size = 0x2000, scoped, tag = 'input window, operand 0']
    #allocation3 [shape = 's32[2]{0}', space=sflag, size = 0x8, scoped, tag = 'scoped memory for tpu_custom_call.1']
    #allocation4 [shape = 's32[2]{0}', space=sflag, size = 0x8, scoped, tag = 'scoped memory for tpu_custom_call.1']
    #allocation5 [shape = 'u8[2048]{0}', space=vmem, size = 0x800, scoped, tag = 'input window, operand 1']
    #allocation6 [shape = 's32[2]{0}', space=sflag, size = 0x8, scoped, tag = 'scoped memory for tpu_custom_call.1']
    #allocation7 [shape = 'u8[2048]{0}', space=vmem, size = 0x800, scoped, tag = 'output window, operand 0']
    %7 = vsyncpa [#allocation3], 0
    %s8 = scalar_lea.sflag [#allocation3], 1
    %9 = vsyncpa %s8, 0
    %10 = vsyncpa [#allocation6], 0
    %s11 = scalar_lea.sflag [#allocation6], 1
    %12 = vsyncpa %s11, 0
    %13 = vsyncpa [#allocation4], 0
    %s14 = scalar_lea.sflag [#allocation4], 1
    %15 = vsyncpa %s14, 0
    loop: start=0, step=1, limit=4
    $region2: #{tpu_custom_call.1} parent=1 // loop_pre_header
      _
    $region3: #{tpu_custom_call.1} parent=1 // loop_header
      %s17 = sphi 0, %s21
      %p18 = scmp.ge.s32.totalorder %s17, 4
      %s24 = sphi 0, %s36
      %s25 = sphi 0, %s32
      %s26 = sphi 0, %s24
      %s27 = sphi 0, %s25
      %s28 = sphi 0, %s26
      %s29 = sphi 0, %s27
      %s41 = sphi 0, %s43
      %s44 = sphi 0, %s41
      %s45 = sphi 0, %s44
      %s61 = sphi 0, %s45
      %s69 = sphi 0, %s71
      %s72 = sphi 0, %s69
      %s73 = sphi 0, %s72
      %s89 = sphi 0, %s73
      %s97 = sphi 0, %s99
      %s100 = sphi 0, %s97
      %s101 = sphi 0, %s100
      %s117 = sphi 0, %s101
    $region4: #{tpu_custom_call.1} parent=1 // loop_header_branch
      %20 = sbr.rel (%p18) target = $region8
    $region5: #{tpu_custom_call.1} parent=1 // loop_body
      %s22 = ssub.s32 %s17, 1
      %s23 = ssub.s32 %s17, 2
      %s30 = sadd.s32 1, %s25
      %p31 = scmp.ge.s32.totalorder %s30, 1
      %s32 = scalar_select %p31, 0, %s30
      %s33 = sadd.s32 1, %s24
      %s34 = scalar_select %p31, %s33, %s24
      %p35 = scmp.ge.s32.totalorder %s34, 2
      %s36 = scalar_select %p35, 0, %s34
      %s37 = ssub.s32 %s24, %s36
      %s38 = ssub.s32 %s25, %s32
      %s39 = sor.u32 %s37, %s38
      %p40 = scmp.eq.s32.totalorder %s39, 0
      %s42 = sadd.s32 %s41, 1
      %s43 = scalar_select %p40, %s41, %s42
      %p46 = pneg %p40
      %p47 = scmp.eq.s32.totalorder %s17, 1
      %p48 = por %p46, %p47
      %p49 = scmp.ne.s32.totalorder %s41, %s44
      %p50 = scmp.eq.s32.totalorder %s17, 0
      %p51 = por %p49, %p50
      %p52 = scmp.ne.s32.totalorder %s41, %s44
      %p53 = scmp.eq.s32.totalorder %s22, 1
      %p54 = por %p52, %p53
      %p55 = scmp.ne.s32.totalorder %s44, %s45
      %p56 = scmp.eq.s32.totalorder %s22, 0
      %p57 = por %p55, %p56
      %p58 = scmp.ne.s32.totalorder %s44, %s45
      %p59 = scmp.eq.s32.totalorder %s23, 1
      %p60 = por %p58, %p59
      %p62 = scmp.ne.s32.totalorder %s45, %s61
      %p63 = scmp.eq.s32.totalorder %s23, 0
      %p64 = por %p62, %p63
      %s65 = ssub.s32 %s24, %s36
      %s66 = ssub.s32 %s25, %s32
      %s67 = sor.u32 %s65, %s66
      %p68 = scmp.eq.s32.totalorder %s67, 0
      %s70 = sadd.s32 %s69, 1
      %s71 = scalar_select %p68, %s69, %s70
      %p74 = pneg %p68
      %p75 = scmp.eq.s32.totalorder %s17, 1
      %p76 = por %p74, %p75
      %p77 = scmp.ne.s32.totalorder %s69, %s72
      %p78 = scmp.eq.s32.totalorder %s17, 0
      %p79 = por %p77, %p78
      %p80 = scmp.ne.s32.totalorder %s69, %s72
      %p81 = scmp.eq.s32.totalorder %s22, 1
      %p82 = por %p80, %p81
      %p83 = scmp.ne.s32.totalorder %s72, %s73
      %p84 = scmp.eq.s32.totalorder %s22, 0
      %p85 = por %p83, %p84
      %p86 = scmp.ne.s32.totalorder %s72, %s73
      %p87 = scmp.eq.s32.totalorder %s23, 1
      %p88 = por %p86, %p87
      %p90 = scmp.ne.s32.totalorder %s73, %s89
      %p91 = scmp.eq.s32.totalorder %s23, 0
      %p92 = por %p90, %p91
      %s93 = ssub.s32 %s24, %s36
      %s94 = ssub.s32 %s25, %s32
      %s95 = sor.u32 %s93, %s94
      %p96 = scmp.eq.s32.totalorder %s95, 0
      %s98 = sadd.s32 %s97, 1
      %s99 = scalar_select %p96, %s97, %s98
      %p102 = pneg %p96
      %p103 = scmp.eq.s32.totalorder %s17, 1
      %p104 = por %p102, %p103
      %p105 = scmp.ne.s32.totalorder %s97, %s100
      %p106 = scmp.eq.s32.totalorder %s17, 0
      %p107 = por %p105, %p106
      %p108 = scmp.ne.s32.totalorder %s97, %s100
      %p109 = scmp.eq.s32.totalorder %s22, 1
      %p110 = por %p108, %p109
      %p111 = scmp.ne.s32.totalorder %s100, %s101
      %p112 = scmp.eq.s32.totalorder %s22, 0
      %p113 = por %p111, %p112
      %p114 = scmp.ne.s32.totalorder %s100, %s101
      %p115 = scmp.eq.s32.totalorder %s23, 1
      %p116 = por %p114, %p115
      %p118 = scmp.ne.s32.totalorder %s101, %s117
      %p119 = scmp.eq.s32.totalorder %s23, 0
      %p120 = por %p118, %p119
      %p121 = scmp.le.s32.totalorder 1, %s17
      %p122 = scmp.lt.s32.totalorder %s17, 3
      %p123 = pnand %p121, %p122
      %p124 = pneg %p123
      // Predicated region
      $region9: #{tpu_custom_call.1} parent=5 // pred_check
        _
      $region10: #{tpu_custom_call.1} parent=5 // pred_check_branch
        %126 = sbr.rel (%p123) target = $region12
      $region11: #{tpu_custom_call.1} parent=5 // pred_region
        %s127 = ssub.s32 %s17, 1
      $region12: #{tpu_custom_call.1} parent=5 // pred_fallthru
        _
      %p128 = scmp.lt.s32.totalorder %s17, 2
      // Predicated region
      $region13: #{tpu_custom_call.1} parent=5 // pred_check
        %p129 = pneg %p128
      $region14: #{tpu_custom_call.1} parent=5 // pred_check_branch
        %131 = sbr.rel (%p129) target = $region16
      $region15: #{tpu_custom_call.1} parent=5 // pred_region
        // Predicated region
        $region17: #{tpu_custom_call.1} parent=15 // pred_check
          %p132 = pneg %p51
        $region18: #{tpu_custom_call.1} parent=15 // pred_check_branch
          %134 = sbr.rel (%p132) target = $region20
        $region19: #{tpu_custom_call.1} parent=15 // pred_region
          %s135 = sand.u32 %s41, 1
          %s136 = scalar_lea.sflag [#allocation3], %s135
          %s137 = sand.u32 %s41, 1
          %s138 = smul.addr %s137, 8
          %s139 = scalar_lea.vmem [#allocation2], %s138
          %141 = vsyncadd %s136, 0
          %s142 = smul.addr %s24, 4
          %s143 = sadd.s32 %s25, %s142
          %s144 = smul.addr %s143, 2
          %s145 = scalar_lea.hbm %s0, %s144
          %s146 = sshll.u32 %s145, 4
          %s147 = int_to_ptr.hbm [resolvable:$true] %s146
          %s148 = sshll.u32 %s139, 4
          %s149 = int_to_ptr.vmem [resolvable:$true] %s148
          %154 = dma.hbm_to_vmem [thread:$0]  %s147, 128, %s149, %s136, 32, 32, 2
        $region20: #{tpu_custom_call.1} parent=15 // pred_fallthru
          _
        // Predicated region
        $region21: #{tpu_custom_call.1} parent=15 // pred_check
          %p155 = pneg %p79
        $region22: #{tpu_custom_call.1} parent=15 // pred_check_branch
          %157 = sbr.rel (%p155) target = $region24
        $region23: #{tpu_custom_call.1} parent=15 // pred_region
          %s158 = sand.u32 %s69, 1
          %s159 = scalar_lea.sflag [#allocation6], %s158
          %s160 = sand.u32 %s69, 1
          %s161 = smul.addr %s160, 2
          %s162 = scalar_lea.vmem [#allocation5], %s161
          %164 = vsyncadd %s159, 0
          %s165 = sadd.s32 %s25, %s24
          %s166 = smul.addr %s165, 2
          %s167 = scalar_lea.hbm %s1, %s166
          %s169 = sshll.u32 %s167, 4
          %s170 = int_to_ptr.hbm [resolvable:$true] %s169
          %s171 = sshll.u32 %s162, 4
          %s172 = int_to_ptr.vmem [resolvable:$true] %s171
          %174 = dma.hbm_to_vmem [thread:$0]  %s170, 32, %s172, %s159
        $region24: #{tpu_custom_call.1} parent=15 // pred_fallthru
          _
      $region16: #{tpu_custom_call.1} parent=5 // pred_fallthru
        _
      %p175 = scmp.le.s32.totalorder 1, %s17
      %p176 = scmp.lt.s32.totalorder %s17, 3
      %p177 = pnand %p175, %p176
      %p178 = pneg %p177
      // Predicated region
      $region25: #{tpu_custom_call.1} parent=5 // pred_check
        _
      $region26: #{tpu_custom_call.1} parent=5 // pred_check_branch
        %180 = sbr.rel (%p177) target = $region28
      $region27: #{tpu_custom_call.1} parent=5 // pred_region
        %s181 = ssub.s32 %s17, 1
        %s182 = sand.u32 %s44, 1
        %s183 = scalar_lea.sflag [#allocation3], %s182
        %s184 = sand.u32 %s44, 1
        %s185 = smul.addr %s184, 8
        %s186 = scalar_lea.vmem [#allocation2], %s185
        // Predicated region
        $region29: #{tpu_custom_call.1} parent=27 // pred_check
          %p187 = pneg %p57
        $region30: #{tpu_custom_call.1} parent=27 // pred_check_branch
          %189 = sbr.rel (%p187) target = $region32
        $region31: #{tpu_custom_call.1} parent=27 // pred_region
          %191 = dma.done %s183, 128
        $region32: #{tpu_custom_call.1} parent=27 // pred_fallthru
          _
        %s192 = sand.u32 %s72, 1
        %s193 = scalar_lea.sflag [#allocation6], %s192
        %s194 = sand.u32 %s72, 1
        %s195 = smul.addr %s194, 2
        %s196 = scalar_lea.vmem [#allocation5], %s195
        // Predicated region
        $region33: #{tpu_custom_call.1} parent=27 // pred_check
          %p197 = pneg %p85
        $region34: #{tpu_custom_call.1} parent=27 // pred_check_branch
          %199 = sbr.rel (%p197) target = $region36
        $region35: #{tpu_custom_call.1} parent=27 // pred_region
          %201 = dma.done %s193, 32
        $region36: #{tpu_custom_call.1} parent=27 // pred_fallthru
          _
        %s202 = sand.u32 %s44, 1
        %s203 = scalar_lea.sflag [#allocation3], %s202
        %s204 = sand.u32 %s44, 1
        %s205 = smul.addr %s204, 8
        %s206 = scalar_lea.vmem [#allocation2], %s205
        %p207 = pneg %p57
        %p208 = pneg %p54
        %s209 = sand.u32 %s72, 1
        %s210 = scalar_lea.sflag [#allocation6], %s209
        %s211 = sand.u32 %s72, 1
        %s212 = smul.addr %s211, 2
        %s213 = scalar_lea.vmem [#allocation5], %s212
        %p214 = pneg %p85
        %p215 = pneg %p82
        %p216 = pneg %p113
        %p217 = pneg %p110
        %s218 = sand.u32 %s100, 1
        %s219 = scalar_lea.sflag [#allocation4], %s218
        %s220 = sand.u32 %s100, 1
        %s221 = smul.addr %s220, 2
        %s222 = scalar_lea.vmem [#allocation7], %s221
        %v223 = vld [vmem:[%s196] sm:$0x3]
        %v224 = vld [vmem:[%s186] sm:$0x3]
        %vm225 = vcmp.eq.s32.totalorder %v223, 0
        %v226 = vsel %vm225, %v224, 0.0
        %s227 = scalar_lea.vmem %s186, 2 [#allocation2]
        %v228 = vld [vmem:[%s227] sm:$0x3]
        %v229 = vmax.f32 %v224, %v228
        %vm230 = vcmp.eq.s32.totalorder %v223, 1
        %v231 = vsel %vm230, %v228, %v226
        %s232 = scalar_lea.vmem %s186, 4 [#allocation2]
        %v233 = vld [vmem:[%s232] sm:$0x3]
        %v234 = vmax.f32 %v229, %v233
        %vm235 = vcmp.eq.s32.totalorder %v223, 2
        %v236 = vsel %vm235, %v233, %v231
        %s237 = scalar_lea.vmem %s186, 6 [#allocation2]
        %v238 = vld [vmem:[%s237] sm:$0x3]
        %v239 = vmax.f32 %v234, %v238
        %vm240 = vcmp.eq.s32.totalorder %v223, 3
        %v241 = vsel %vm240, %v238, %v236
        %v242 = vsub.f32 %v224, %v239
        %v243 = vmul.f32 %v242, 1.442695
        %v244 = vpow.pop %v243
        %v245 = vadd.f32 %v244, 0.0
        %v246 = vsub.f32 %v228, %v239
        %v247 = vmul.f32 %v246, 1.442695
        %v248 = vpow.pop %v247
        %v249 = vadd.f32 %v245, %v248
        %v250 = vsub.f32 %v233, %v239
        %v251 = vmul.f32 %v250, 1.442695
        %v252 = vpow.pop %v251
        %v253 = vadd.f32 %v249, %v252
        %v254 = vsub.f32 %v238, %v239
        %v255 = vmul.f32 %v254, 1.442695
        %v256 = vpow.pop %v255
        %v257 = vadd.f32 %v253, %v256
        %v258 = vlog2.pop %v257
        %v259 = vmul.f32 %v258, 0.6931472
        %v260 = vadd.f32 %v259, %v239
        %v261 = vsub.f32 %v260, %v241
        %v262 = vsub.f32 0.0, %v261
        %v263 = vmul.f32 %v262, 1.442695
        %v264 = vpow.pop %v263
        %v265 = vsub.f32 1.0, %v264
        %v266 = vmul.f32 %v265, %v265
        %v267 = vmul.f32 %v266, %v261
        %268 = vst [vmem:[%s222] sm:$0x3] %v267
        %s269 = sand.u32 %s100, 1
        %s270 = scalar_lea.sflag [#allocation4], %s269
        %s271 = sand.u32 %s100, 1
        %s272 = smul.addr %s271, 2
        %s273 = scalar_lea.vmem [#allocation7], %s272
        // Predicated region
        $region37: #{tpu_custom_call.1} parent=27 // pred_check
          %p274 = pneg %p110
        $region38: #{tpu_custom_call.1} parent=27 // pred_check_branch
          %276 = sbr.rel (%p274) target = $region40
        $region39: #{tpu_custom_call.1} parent=27 // pred_region
          %278 = vsyncadd %s270, 0
          %s279 = sadd.s32 %s27, %s26
          %s280 = smul.addr %s279, 2
          %s281 = scalar_lea.hbm %s2, %s280
          %s283 = sshll.u32 %s273, 4
          %s284 = int_to_ptr.vmem [resolvable:$true] %s283
          %s285 = sshll.u32 %s281, 4
          %s286 = int_to_ptr.hbm [resolvable:$true] %s285
          %288 = dma.vmem_to_hbm [thread:$0]  %s284, 32, %s286, %s270
        $region40: #{tpu_custom_call.1} parent=27 // pred_fallthru
          _
      $region28: #{tpu_custom_call.1} parent=5 // pred_fallthru
        _
      %p289 = scmp.le.s32.totalorder 2, %s17
      // Predicated region
      $region41: #{tpu_custom_call.1} parent=5 // pred_check
        %p290 = pneg %p289
      $region42: #{tpu_custom_call.1} parent=5 // pred_check_branch
        %292 = sbr.rel (%p290) target = $region44
      $region43: #{tpu_custom_call.1} parent=5 // pred_region
        %s293 = ssub.s32 %s17, 2
        // Predicated region
        $region45: #{tpu_custom_call.1} parent=43 // pred_check
          %p294 = pneg %p116
        $region46: #{tpu_custom_call.1} parent=43 // pred_check_branch
          %296 = sbr.rel (%p294) target = $region48
        $region47: #{tpu_custom_call.1} parent=43 // pred_region
          %s297 = sand.u32 %s101, 1
          %s298 = scalar_lea.sflag [#allocation4], %s297
          %s299 = sand.u32 %s101, 1
          %s300 = smul.addr %s299, 2
          %s301 = scalar_lea.vmem [#allocation7], %s300
          %303 = dma.done %s298, 32
        $region48: #{tpu_custom_call.1} parent=43 // pred_fallthru
          _
      $region44: #{tpu_custom_call.1} parent=5 // pred_fallthru
        _
    $region6: #{tpu_custom_call.1} parent=1 // loop_footer
      %s21 = sadd.s32 1, %s17
    $region7: #{tpu_custom_call.1} parent=1 // loop_footer_branch
      %16 = sbr.rel target = $region3
    $region8: #{tpu_custom_call.1} parent=1 // loop_exit
      _
    %304 = vsyncpa [#allocation3], 1
    %s305 = scalar_lea.sflag [#allocation3], 1
    %306 = vsyncpa %s305, 1
    %307 = vsyncpa [#allocation6], 1
    %s308 = scalar_lea.sflag [#allocation6], 1
    %309 = vsyncpa %s308, 1
    %310 = vsyncpa [#allocation4], 1
    %s311 = scalar_lea.sflag [#allocation4], 1
    %312 = vsyncpa %s311, 1

</llo_original>
